<compile_context>
chip_gen: v7x
topology: tpu7x:2x2x1
jax: 0.10.0
libtpu: 0.0.40
codegen_flags: <defaults>
</compile_context>

<pallas_src>
import functools

import jax
import jax.numpy as jnp
import numpy as np
from jax.experimental import pallas as pl
from jax.experimental.pallas import tpu as pltpu


def _bilinear_matrix(out_size: int, in_size: int) -> np.ndarray:
    """W (out,in) s.t. y = W @ x matches F.interpolate(mode='bilinear',
    align_corners=False) along one axis (the non-torch-0.4 branch)."""
    w = np.zeros((out_size, in_size), dtype=np.float32)
    scale = in_size / out_size
    for i in range(out_size):
        src = (i + 0.5) * scale - 0.5
        if src < 0.0:
            src = 0.0
        i0 = min(int(np.floor(src)), in_size - 1)
        i1 = min(i0 + 1, in_size - 1)
        frac = src - i0
        w[i, i0] += 1.0 - frac
        w[i, i1] += frac
    return w


def _vmem_caps():
    """(physical VMEM bytes, per-step block+temp budget)."""
    try:
        cap = int(pltpu.get_tpu_info().vmem_capacity_bytes)
    except Exception:
        cap = 64 << 20        # conservative fallback = v7x per-TC VMEM
    budget = max(16 << 20, int(cap * 0.45))   # ~28 MiB on v7x, ~56 MiB on v5e/v6e
    return cap, budget


def _choose_tile_h(h_out, h_in, w_in, w_out, tgt_esize, pred_esize, n_preds,
                   budget_bytes, cap=512):
    """Largest output-row tile whose per-step VMEM footprint (double-buffered
    blocks incl. wh/wwt + f32 temporaries) stays under budget_bytes.
    Returns (tile_h, ragged_last_tile)."""
    fixed = (2 * w_in * w_out * 4                       # wwt block (x2 buffers)
             + 2 * n_preds * h_in * w_in * pred_esize   # pred blocks
             + 2 * w_out * 4)                           # partial-sum output
    per_row = (2 * w_out * tgt_esize                    # target block
               + 2 * h_in * 4                           # wh block
               + 7 * w_out * 4)                         # f32 temporaries (y, z, bce)
    max_rows = max(8, (budget_bytes - fixed) // per_row)
    cap = int(min(cap, max_rows))
    if h_out <= cap:
        return h_out, False
    cap8 = max(8, cap - cap % 8)
    for t in range(cap8, 7, -8):                        # prefer an exact divisor
        if h_out % t == 0:
            return t, False
    return cap8, True                                   # ragged last tile (masked)


def _dsn_kernel(*refs, weights, tile_h, h_valid, ragged):
    n_preds = len(weights)
    pred_refs = refs[:n_preds]
    tgt_ref, wh_ref, wwt_ref, out_ref = refs[n_preds:]

    wh = wh_ref[...]                         # (tile_h, h_in)  f32
    wwt = wwt_ref[...]                       # (w_in,  w_out)  f32
    y = tgt_ref[...].astype(jnp.float32)     # (tile_h, w_out) cast after DMA

    def upsampled(p_ref):
        p = p_ref[...].astype(jnp.float32)               # (h_in, w_in)
        rows = jnp.dot(wh, p, preferred_element_type=jnp.float32)   # (tile_h, w_in)
        return jnp.dot(rows, wwt, preferred_element_type=jnp.float32)  # (tile_h, w_out)

    def bce(z):
        # Numerically stable BCEWithLogits (elementwise):
        #   max(z,0) - z*y + log(1 + exp(-|z|))
        return jnp.maximum(z, 0.0) - z * y + jnp.log1p(jnp.exp(-jnp.abs(z)))

    combined = None
    for w, p_ref in zip(weights, pred_refs):
        if w == 0.0:
            continue
        term = bce(upsampled(p_ref))
        term = term if w == 1.0 else w * term
        combined = term if combined is None else combined + term
    if combined is None:
        combined = jnp.zeros_like(y)

    if ragged:
        # Last row tile overhangs the target: discard garbage rows via select
        # (NOT multiply), so stale NaN/Inf data cannot leak into the sum.
        row0 = pl.program_id(1) * tile_h
        row_ids = row0 + jax.lax.broadcasted_iota(jnp.int32, (tile_h, 1), 0)
        combined = jnp.where(row_ids < h_valid, combined, 0.0)

    # Lane-dense partial-sum row per (plane, row-tile); final reduce in XLA.
    out_ref[...] = jnp.sum(combined, axis=0, keepdims=True)


def _dsn_bce_sum(preds, target, weights):
    """sum over all pixels of sum_i weights[i]*BCEWithLogits(upsample(preds[i]), target)."""
    n_preds = len(preds)
    n, c, h_in, w_in = preds[0].shape
    _, _, h_out, w_out = target.shape
    nc = n * c

    pred_esize = jnp.dtype(preds[0].dtype).itemsize
    tgt_esize = jnp.dtype(target.dtype).itemsize

    vmem_cap, vmem_budget = _vmem_caps()
    tile_h, ragged = _choose_tile_h(h_out, h_in, w_in, w_out,
                                    tgt_esize, pred_esize, n_preds,
                                    budget_bytes=vmem_budget)
    num_row_tiles = pl.cdiv(h_out, tile_h)
    h_pad = num_row_tiles * tile_h

    # Interp matrices (tiny, host-built). wh is padded to the row grid so its
    # blocks never read out of bounds even when the target row tile is ragged.
    wh_np = _bilinear_matrix(h_out, h_in)
    if h_pad != h_out:
        wh_np = np.concatenate(
            [wh_np, np.zeros((h_pad - h_out, h_in), np.float32)], axis=0)
    wh = jnp.asarray(wh_np)                               # (h_pad, h_in)
    wwt = jnp.asarray(_bilinear_matrix(w_out, w_in).T)    # (w_in, w_out)

    # Metadata-only reshapes (no HBM pass); inputs keep their native dtype.
    preds_r = [p.reshape(nc, h_in, w_in) for p in preds]
    tgt_r = target.reshape(nc, h_out, w_out)

    kernel = functools.partial(
        _dsn_kernel,
        weights=tuple(float(w) for w in weights),
        tile_h=tile_h, h_valid=h_out, ragged=ragged)

    footprint = (2 * n_preds * h_in * w_in * pred_esize
                 + 2 * tile_h * w_out * tgt_esize
                 + 2 * tile_h * h_in * 4
                 + 2 * w_in * w_out * 4
                 + 7 * tile_h * w_out * 4
                 + 2 * w_out * 4)
    vmem_limit = int(max(32 << 20,
                         min(footprint + (16 << 20), vmem_cap - (8 << 20))))

    cost = pl.CostEstimate(
        flops=int(n_preds * (2 * nc * h_out * (h_in * w_in + w_in * w_out)
                             + 6 * nc * h_out * w_out)),
        transcendentals=int(2 * n_preds * nc * h_out * w_out),
        bytes_accessed=int(n_preds * nc * h_in * w_in * pred_esize
                           + nc * h_out * w_out * tgt_esize
                           + h_pad * h_in * 4 + w_in * w_out * 4
                           + nc * num_row_tiles * w_out * 4),
    )

    in_specs = (
        [pl.BlockSpec((None, h_in, w_in), lambda p, r: (p, 0, 0))] * n_preds
        + [pl.BlockSpec((None, tile_h, w_out), lambda p, r: (p, r, 0)),
           pl.BlockSpec((tile_h, h_in), lambda p, r: (r, 0)),
           pl.BlockSpec((w_in, w_out), lambda p, r: (0, 0))])

    # Grid-order invariant: keep the row-tile axis (r) innermost so the
    # constant block indices of the preds and wwt elide re-DMA across it.
    # The plane axis (usually even) leads so v7x can split it over its 2 TCs.
    partials = pl.pallas_call(
        kernel,
        out_shape=jax.ShapeDtypeStruct((nc, num_row_tiles, w_out), jnp.float32),
        grid_spec=pltpu.PrefetchScalarGridSpec(
            num_scalar_prefetch=0,
            grid=(nc, num_row_tiles),
            in_specs=in_specs,
            out_specs=pl.BlockSpec((None, 1, w_out), lambda p, r: (p, r, 0)),
        ),
        compiler_params=pltpu.CompilerParams(
            dimension_semantics=("parallel", "parallel"),
            vmem_limit_bytes=vmem_limit),
        cost_estimate=cost,
    )(*preds_r, tgt_r, wh, wwt)

    return jnp.sum(partials)


def criterion_dsn(preds, target, dsn_weight: float = 0.4) -> jax.Array:
    """JAX/Pallas equivalent of CriterionDSN.forward(preds, target)."""
    pred0, pred1 = preds[0], preds[1]
    n, c, h_out, w_out = target.shape
    count = jnp.float32(n * c * h_out * w_out)

    if pred0.shape == pred1.shape:
        # Fused: both BCE terms computed from one pass over the target.
        total = _dsn_bce_sum((pred0, pred1), target, (dsn_weight, 1.0))
    else:
        # Rare: DSN heads at different resolutions -> two single-pred calls
        # (no DMA of an unused pred block).
        total = (_dsn_bce_sum((pred0,), target, (dsn_weight,))
                 + _dsn_bce_sum((pred1,), target, (1.0,)))

    # Both losses are means over the same element count (the target size).
    return total / count


if __name__ == "__main__":
    key = jax.random.PRNGKey(0)
    k0, k1, k2 = jax.random.split(key, 3)

    # Small shapes: batch=2, channels=4, target spatial 16x16,
    # DSN predictions at 1/2 resolution (8x8).
    n, c, h, w = 2, 4, 16, 16
    pred0 = jax.random.normal(k0, (n, c, h // 2, w // 2), dtype=jnp.float32)
    pred1 = jax.random.normal(k1, (n, c, h // 2, w // 2), dtype=jnp.float32)
    target = jax.random.uniform(k2, (n, c, h, w), dtype=jnp.float32)

    loss = criterion_dsn((pred0, pred1), target, dsn_weight=0.4)
    jax.block_until_ready(loss)
    print("KERNEL_OK")
</pallas_src>

<mosaic_0001>
module attributes {stable_mosaic.version = 11 : i64} {
  func.func @_dsn_kernel(%arg0: i32, %arg1: i32, %arg2: memref<1x8x8xf32, #tpu.memory_space<vmem>>, %arg3: memref<1x8x8xf32, #tpu.memory_space<vmem>>, %arg4: memref<1x16x16xf32, #tpu.memory_space<vmem>>, %arg5: memref<16x8xf32, #tpu.memory_space<vmem>>, %arg6: memref<8x16xf32, #tpu.memory_space<vmem>>, %arg7: memref<1x1x16xf32, #tpu.memory_space<vmem>>) attributes {dimension_semantics = [#tpu.dimension_semantics<parallel>, #tpu.dimension_semantics<parallel>], iteration_bounds = array<i64: 8, 1>, scalar_prefetch = 0 : i64, scratch_operands = 0 : i64, tpu.core_type = #tpu.core_type<tc>, window_params = [{transform_indices = @transform_0, window_bounds = array<i64: 1, 8, 8>}, {transform_indices = @transform_1, window_bounds = array<i64: 1, 8, 8>}, {transform_indices = @transform_2, window_bounds = array<i64: 1, 16, 16>}, {transform_indices = @transform_3, window_bounds = array<i64: 16, 8>}, {pipeline_mode = #tpu.pipeline_mode<synchronous>, transform_indices = @transform_4, window_bounds = array<i64: 8, 16>}, {transform_indices = @transform_5, window_bounds = array<i64: 1, 1, 16>}]} {
    %c0 = arith.constant 0 : index
    %c0_0 = arith.constant 0 : index
    %0 = vector.load %arg5[%c0, %c0_0] : memref<16x8xf32, #tpu.memory_space<vmem>>, vector<16x8xf32>
    %c0_1 = arith.constant 0 : index
    %c0_2 = arith.constant 0 : index
    %1 = vector.load %arg6[%c0_1, %c0_2] : memref<8x16xf32, #tpu.memory_space<vmem>>, vector<8x16xf32>
    %c0_3 = arith.constant 0 : index
    %c0_4 = arith.constant 0 : index
    %c0_5 = arith.constant 0 : index
    %2 = vector.load %arg4[%c0_3, %c0_4, %c0_5] : memref<1x16x16xf32, #tpu.memory_space<vmem>>, vector<1x16x16xf32>
    %3 = vector.shape_cast %2 : vector<1x16x16xf32> to vector<16x16xf32>
    %c0_6 = arith.constant 0 : index
    %c0_7 = arith.constant 0 : index
    %c0_8 = arith.constant 0 : index
    %4 = vector.load %arg2[%c0_6, %c0_7, %c0_8] : memref<1x8x8xf32, #tpu.memory_space<vmem>>, vector<1x8x8xf32>
    %5 = vector.shape_cast %4 : vector<1x8x8xf32> to vector<8x8xf32>
    %cst = arith.constant dense<0.000000e+00> : vector<16x8xf32>
    %6 = tpu.matmul %0, %5, %cst {dimension_numbers = #tpu.dot_dimension_numbers<[1], [0], [0], [1], [0, 0, 1, 1], [], []>} : vector<16x8xf32>, vector<8x8xf32>, vector<16x8xf32> -> vector<16x8xf32>
    %cst_9 = arith.constant dense<0.000000e+00> : vector<16x16xf32>
    %7 = tpu.matmul %6, %1, %cst_9 {dimension_numbers = #tpu.dot_dimension_numbers<[1], [0], [0], [1], [0, 0, 1, 1], [], []>} : vector<16x8xf32>, vector<8x16xf32>, vector<16x16xf32> -> vector<16x16xf32>
    %cst_10 = arith.constant 0.000000e+00 : f32
    %8 = vector.broadcast %cst_10 : f32 to vector<16x16xf32>
    %9 = arith.maximumf %7, %8 : vector<16x16xf32>
    %10 = arith.mulf %7, %3 : vector<16x16xf32>
    %11 = arith.subf %9, %10 : vector<16x16xf32>
    %12 = math.absf %7 : vector<16x16xf32>
    %cst_11 = arith.constant 0.000000e+00 : f32
    %13 = vector.broadcast %cst_11 : f32 to vector<16x16xf32>
    %14 = arith.subf %13, %12 : vector<16x16xf32>
    %15 = math.exp %14 : vector<16x16xf32>
    %16 = math.log1p %15 : vector<16x16xf32>
    %17 = arith.addf %11, %16 : vector<16x16xf32>
    %cst_12 = arith.constant 4.000000e-01 : f32
    %18 = vector.broadcast %cst_12 : f32 to vector<16x16xf32>
    %19 = arith.mulf %18, %17 : vector<16x16xf32>
    %c0_13 = arith.constant 0 : index
    %c0_14 = arith.constant 0 : index
    %c0_15 = arith.constant 0 : index
    %20 = vector.load %arg3[%c0_13, %c0_14, %c0_15] : memref<1x8x8xf32, #tpu.memory_space<vmem>>, vector<1x8x8xf32>
    %21 = vector.shape_cast %20 : vector<1x8x8xf32> to vector<8x8xf32>
    %cst_16 = arith.constant dense<0.000000e+00> : vector<16x8xf32>
    %22 = tpu.matmul %0, %21, %cst_16 {dimension_numbers = #tpu.dot_dimension_numbers<[1], [0], [0], [1], [0, 0, 1, 1], [], []>} : vector<16x8xf32>, vector<8x8xf32>, vector<16x8xf32> -> vector<16x8xf32>
    %cst_17 = arith.constant dense<0.000000e+00> : vector<16x16xf32>
    %23 = tpu.matmul %22, %1, %cst_17 {dimension_numbers = #tpu.dot_dimension_numbers<[1], [0], [0], [1], [0, 0, 1, 1], [], []>} : vector<16x8xf32>, vector<8x16xf32>, vector<16x16xf32> -> vector<16x16xf32>
    %cst_18 = arith.constant 0.000000e+00 : f32
    %24 = vector.broadcast %cst_18 : f32 to vector<16x16xf32>
    %25 = arith.maximumf %23, %24 : vector<16x16xf32>
    %26 = arith.mulf %23, %3 : vector<16x16xf32>
    %27 = arith.subf %25, %26 : vector<16x16xf32>
    %28 = math.absf %23 : vector<16x16xf32>
    %cst_19 = arith.constant 0.000000e+00 : f32
    %29 = vector.broadcast %cst_19 : f32 to vector<16x16xf32>
    %30 = arith.subf %29, %28 : vector<16x16xf32>
    %31 = math.exp %30 : vector<16x16xf32>
    %32 = math.log1p %31 : vector<16x16xf32>
    %33 = arith.addf %27, %32 : vector<16x16xf32>
    %34 = arith.addf %19, %33 : vector<16x16xf32>
    %cst_20 = arith.constant dense<0.000000e+00> : vector<16xf32>
    %35 = vector.multi_reduction <add>, %34, %cst_20 [0] : vector<16x16xf32> to vector<16xf32>
    %36 = vector.shape_cast %35 : vector<16xf32> to vector<1x16xf32>
    %c0_21 = arith.constant 0 : index
    %c0_22 = arith.constant 0 : index
    %c0_23 = arith.constant 0 : index
    %37 = vector.load %arg7[%c0_21, %c0_22, %c0_23] : memref<1x1x16xf32, #tpu.memory_space<vmem>>, vector<1x1x16xf32>
    %38 = vector.shape_cast %37 : vector<1x1x16xf32> to vector<1x16xf32>
    %39 = vector.shape_cast %36 : vector<1x16xf32> to vector<1x1x16xf32>
    tpu.vector_store %arg7[%c0_21, %c0_22, %c0_23], %39 {strides = array<i32>} : memref<1x1x16xf32, #tpu.memory_space<vmem>>, vector<1x1x16xf32>,
    return
  }
  func.func @transform_0(%arg0: i32, %arg1: i32) -> (i32, i32, i32) {
    %c0_i32 = arith.constant 0 : i32
    %c0_i32_0 = arith.constant 0 : i32
    %c0_i32_1 = arith.constant 0 : i32
    return %arg0, %c0_i32, %c0_i32_0 : i32, i32, i32
  }
  func.func @transform_1(%arg0: i32, %arg1: i32) -> (i32, i32, i32) {
    %c0_i32 = arith.constant 0 : i32
    %c0_i32_0 = arith.constant 0 : i32
    %c0_i32_1 = arith.constant 0 : i32
    return %arg0, %c0_i32, %c0_i32_0 : i32, i32, i32
  }
  func.func @transform_2(%arg0: i32, %arg1: i32) -> (i32, i32, i32) {
    %c0_i32 = arith.constant 0 : i32
    %c0_i32_0 = arith.constant 0 : i32
    return %arg0, %arg1, %c0_i32 : i32, i32, i32
  }
  func.func @transform_3(%arg0: i32, %arg1: i32) -> (i32, i32) {
    %c0_i32 = arith.constant 0 : i32
    %c0_i32_0 = arith.constant 0 : i32
    return %arg1, %c0_i32 : i32, i32
  }
  func.func @transform_4(%arg0: i32, %arg1: i32) -> (i32, i32) {
    %c0_i32 = arith.constant 0 : i32
    %c0_i32_0 = arith.constant 0 : i32
    %c0_i32_1 = arith.constant 0 : i32
    return %c0_i32, %c0_i32_0 : i32, i32
  }
  func.func @transform_5(%arg0: i32, %arg1: i32) -> (i32, i32, i32) {
    %c0_i32 = arith.constant 0 : i32
    %c0_i32_0 = arith.constant 0 : i32
    return %arg0, %arg1, %c0_i32 : i32, i32, i32
  }
}

</mosaic_0001>

<llo_original>
// kernel: tpu_custom_call.1
$region0: #{tpu_custom_call.1}
  #allocation0 [shape = 'u32[]', space=smem, size = 0x4, offset = 0x4, fixed_abs, tag = 'smem constant byte address 0x4 - core index']
  #allocation1 [shape = 'u32[144,128]{1,0:T(1,128)}', space=vmem, size = 0x12000, scoped, tag = 'internal scratch']
  %s0 = inlined_call_operand.hbm [shape: f32[8,8,8], index: 0, kind: input, shape index: {}]
  %s1 = inlined_call_operand.hbm [shape: f32[8,8,8], index: 1, kind: input, shape index: {}]
  %s2 = inlined_call_operand.hbm [shape: f32[8,16,16], index: 2, kind: input, shape index: {}]
  %s3 = inlined_call_operand.vmem [shape: f32[16,8], index: 3, kind: input, shape index: {}]
  %s4 = inlined_call_operand.vmem [shape: f32[8,16], index: 4, kind: input, shape index: {}]
  %s5 = inlined_call_operand.hbm [shape: f32[8,1,16], index: 5, kind: output, shape index: {}]
  %s6 = sld [smem:[#allocation0]]
  $region65: #{tpu_custom_call.1} parent=0
    _
  %s8 = ssub.s32 1, %s6
  %s9 = scalar_select 0, %s8, %s6
  $region1: #{tpu_custom_call.1} parent=0
    #allocation2 [shape = 'u8[8192]{0}', space=vmem, size = 0x2000, scoped, tag = 'input window, operand 0']
    #allocation3 [shape = 's32[2]{0}', space=sflag, size = 0x8, scoped, tag = 'scoped memory for tpu_custom_call.1']
    #allocation4 [shape = 's32[2]{0}', space=sflag, size = 0x8, scoped, tag = 'scoped memory for tpu_custom_call.1']
    #allocation5 [shape = 'u8[8192]{0}', space=vmem, size = 0x2000, scoped, tag = 'input window, operand 1']
    #allocation6 [shape = 's32[2]{0}', space=sflag, size = 0x8, scoped, tag = 'scoped memory for tpu_custom_call.1']
    #allocation7 [shape = 'u8[16384]{0}', space=vmem, size = 0x4000, scoped, tag = 'input window, operand 2']
    #allocation8 [shape = 'u8[1024]{0}', space=vmem, size = 0x400, scoped, tag = 'output window, operand 0']
    %10 = vsyncpa [#allocation3], 0
    %s11 = scalar_lea.sflag [#allocation3], 1
    %12 = vsyncpa %s11, 0
    %13 = vsyncpa [#allocation6], 0
    %s14 = scalar_lea.sflag [#allocation6], 1
    %15 = vsyncpa %s14, 0
    %16 = vsyncpa [#allocation4], 0
    %s17 = scalar_lea.sflag [#allocation4], 1
    %18 = vsyncpa %s17, 0
    loop: start=0, step=1, limit=10
    $region2: #{tpu_custom_call.1} parent=1 // loop_pre_header
      _
    $region3: #{tpu_custom_call.1} parent=1 // loop_header
      %s20 = sphi 0, %s24
      %p21 = scmp.ge.s32.totalorder %s20, 10
      %s27 = sphi 0, %s39
      %s28 = sphi 0, %s35
      %s29 = sphi 0, %s27
      %s30 = sphi 0, %s28
      %s31 = sphi 0, %s29
      %s32 = sphi 0, %s30
      %s42 = sphi 0, %s44
      %s45 = sphi 0, %s42
      %s46 = sphi 0, %s45
      %s62 = sphi 0, %s46
      %s68 = sphi 0, %s70
      %s71 = sphi 0, %s68
      %s72 = sphi 0, %s71
      %s88 = sphi 0, %s72
      %s96 = sphi 0, %s98
      %s99 = sphi 0, %s96
      %s100 = sphi 0, %s99
      %s116 = sphi 0, %s100
      %s122 = sphi 0, %s124
      %s125 = sphi 0, %s122
      %s126 = sphi 0, %s125
      %s142 = sphi 0, %s126
      %s146 = sphi 0, %s146
      %s148 = sphi 0, %s146
      %s149 = sphi 0, %s148
      %s163 = sphi 0, %s149
      %s171 = sphi 0, %s173
      %s174 = sphi 0, %s171
      %s175 = sphi 0, %s174
      %s191 = sphi 0, %s175
    $region4: #{tpu_custom_call.1} parent=1 // loop_header_branch
      %23 = sbr.rel (%p21) target = $region8
    $region5: #{tpu_custom_call.1} parent=1 // loop_body
      %s25 = ssub.s32 %s20, 1
      %s26 = ssub.s32 %s20, 2
      %s33 = sadd.s32 1, %s28
      %p34 = scmp.ge.s32.totalorder %s33, 1
      %s35 = scalar_select %p34, 0, %s33
      %s36 = sadd.s32 1, %s27
      %s37 = scalar_select %p34, %s36, %s27
      %p38 = scmp.ge.s32.totalorder %s37, 8
      %s39 = scalar_select %p38, 0, %s37
      %s40 = ssub.s32 %s27, %s39
      %p41 = scmp.eq.s32.totalorder %s40, 0
      %s43 = sadd.s32 %s42, 1
      %s44 = scalar_select %p41, %s42, %s43
      %p47 = pneg %p41
      %p48 = scmp.eq.s32.totalorder %s20, 7
      %p49 = por %p47, %p48
      %p50 = scmp.ne.s32.totalorder %s42, %s45
      %p51 = scmp.eq.s32.totalorder %s20, 0
      %p52 = por %p50, %p51
      %p53 = scmp.ne.s32.totalorder %s42, %s45
      %p54 = scmp.eq.s32.totalorder %s25, 7
      %p55 = por %p53, %p54
      %p56 = scmp.ne.s32.totalorder %s45, %s46
      %p57 = scmp.eq.s32.totalorder %s25, 0
      %p58 = por %p56, %p57
      %p59 = scmp.ne.s32.totalorder %s45, %s46
      %p60 = scmp.eq.s32.totalorder %s26, 7
      %p61 = por %p59, %p60
      %p63 = scmp.ne.s32.totalorder %s46, %s62
      %p64 = scmp.eq.s32.totalorder %s26, 0
      %p65 = por %p63, %p64
      %s66 = ssub.s32 %s27, %s39
      %p67 = scmp.eq.s32.totalorder %s66, 0
      %s69 = sadd.s32 %s68, 1
      %s70 = scalar_select %p67, %s68, %s69
      %p73 = pneg %p67
      %p74 = scmp.eq.s32.totalorder %s20, 7
      %p75 = por %p73, %p74
      %p76 = scmp.ne.s32.totalorder %s68, %s71
      %p77 = scmp.eq.s32.totalorder %s20, 0
      %p78 = por %p76, %p77
      %p79 = scmp.ne.s32.totalorder %s68, %s71
      %p80 = scmp.eq.s32.totalorder %s25, 7
      %p81 = por %p79, %p80
      %p82 = scmp.ne.s32.totalorder %s71, %s72
      %p83 = scmp.eq.s32.totalorder %s25, 0
      %p84 = por %p82, %p83
      %p85 = scmp.ne.s32.totalorder %s71, %s72
      %p86 = scmp.eq.s32.totalorder %s26, 7
      %p87 = por %p85, %p86
      %p89 = scmp.ne.s32.totalorder %s72, %s88
      %p90 = scmp.eq.s32.totalorder %s26, 0
      %p91 = por %p89, %p90
      %s92 = ssub.s32 %s27, %s39
      %s93 = ssub.s32 %s28, %s35
      %s94 = sor.u32 %s92, %s93
      %p95 = scmp.eq.s32.totalorder %s94, 0
      %s97 = sadd.s32 %s96, 1
      %s98 = scalar_select %p95, %s96, %s97
      %p101 = pneg %p95
      %p102 = scmp.eq.s32.totalorder %s20, 7
      %p103 = por %p101, %p102
      %p104 = scmp.ne.s32.totalorder %s96, %s99
      %p105 = scmp.eq.s32.totalorder %s20, 0
      %p106 = por %p104, %p105
      %p107 = scmp.ne.s32.totalorder %s96, %s99
      %p108 = scmp.eq.s32.totalorder %s25, 7
      %p109 = por %p107, %p108
      %p110 = scmp.ne.s32.totalorder %s99, %s100
      %p111 = scmp.eq.s32.totalorder %s25, 0
      %p112 = por %p110, %p111
      %p113 = scmp.ne.s32.totalorder %s99, %s100
      %p114 = scmp.eq.s32.totalorder %s26, 7
      %p115 = por %p113, %p114
      %p117 = scmp.ne.s32.totalorder %s100, %s116
      %p118 = scmp.eq.s32.totalorder %s26, 0
      %p119 = por %p117, %p118
      %s120 = ssub.s32 %s28, %s35
      %p121 = scmp.eq.s32.totalorder %s120, 0
      %s123 = sadd.s32 %s122, 1
      %s124 = scalar_select %p121, %s122, %s123
      %p127 = pneg %p121
      %p128 = scmp.eq.s32.totalorder %s20, 7
      %p129 = por %p127, %p128
      %p130 = scmp.ne.s32.totalorder %s122, %s125
      %p131 = scmp.eq.s32.totalorder %s20, 0
      %p132 = por %p130, %p131
      %p133 = scmp.ne.s32.totalorder %s122, %s125
      %p134 = scmp.eq.s32.totalorder %s25, 7
      %p135 = por %p133, %p134
      %p136 = scmp.ne.s32.totalorder %s125, %s126
      %p137 = scmp.eq.s32.totalorder %s25, 0
      %p138 = por %p136, %p137
      %p139 = scmp.ne.s32.totalorder %s125, %s126
      %p140 = scmp.eq.s32.totalorder %s26, 7
      %p141 = por %p139, %p140
      %p143 = scmp.ne.s32.totalorder %s126, %s142
      %p144 = scmp.eq.s32.totalorder %s26, 0
      %p145 = por %p143, %p144
      %s147 = sadd.s32 %s146, 1
      %p150 = scmp.eq.s32.totalorder %s20, 7
      %p151 = scmp.ne.s32.totalorder %s146, %s148
      %p152 = scmp.eq.s32.totalorder %s20, 0
      %p153 = por %p151, %p152
      %p154 = scmp.ne.s32.totalorder %s146, %s148
      %p155 = scmp.eq.s32.totalorder %s25, 7
      %p156 = por %p154, %p155
      %p157 = scmp.ne.s32.totalorder %s148, %s149
      %p158 = scmp.eq.s32.totalorder %s25, 0
      %p159 = por %p157, %p158
      %p160 = scmp.ne.s32.totalorder %s148, %s149
      %p161 = scmp.eq.s32.totalorder %s26, 7
      %p162 = por %p160, %p161
      %p164 = scmp.ne.s32.totalorder %s149, %s163
      %p165 = scmp.eq.s32.totalorder %s26, 0
      %p166 = por %p164, %p165
      %s167 = ssub.s32 %s27, %s39
      %s168 = ssub.s32 %s28, %s35
      %s169 = sor.u32 %s167, %s168
      %p170 = scmp.eq.s32.totalorder %s169, 0
      %s172 = sadd.s32 %s171, 1
      %s173 = scalar_select %p170, %s171, %s172
      %p176 = pneg %p170
      %p177 = scmp.eq.s32.totalorder %s20, 7
      %p178 = por %p176, %p177
      %p179 = scmp.ne.s32.totalorder %s171, %s174
      %p180 = scmp.eq.s32.totalorder %s20, 0
      %p181 = por %p179, %p180
      %p182 = scmp.ne.s32.totalorder %s171, %s174
      %p183 = scmp.eq.s32.totalorder %s25, 7
      %p184 = por %p182, %p183
      %p185 = scmp.ne.s32.totalorder %s174, %s175
      %p186 = scmp.eq.s32.totalorder %s25, 0
      %p187 = por %p185, %p186
      %p188 = scmp.ne.s32.totalorder %s174, %s175
      %p189 = scmp.eq.s32.totalorder %s26, 7
      %p190 = por %p188, %p189
      %p192 = scmp.ne.s32.totalorder %s175, %s191
      %p193 = scmp.eq.s32.totalorder %s26, 0
      %p194 = por %p192, %p193
      %p195 = scmp.le.s32.totalorder 1, %s20
      %p196 = scmp.lt.s32.totalorder %s20, 9
      %p197 = pnand %p195, %p196
      %p198 = pneg %p197
      // Predicated region
      $region9: #{tpu_custom_call.1} parent=5 // pred_check
        _
      $region10: #{tpu_custom_call.1} parent=5 // pred_check_branch
        %200 = sbr.rel (%p197) target = $region12
      $region11: #{tpu_custom_call.1} parent=5 // pred_region
        %s201 = ssub.s32 %s20, 1
        // Predicated region
        $region13: #{tpu_custom_call.1} parent=11 // pred_check
          %p202 = pneg %p138
        $region14: #{tpu_custom_call.1} parent=11 // pred_check_branch
          %204 = sbr.rel (%p202) target = $region16
        $region15: #{tpu_custom_call.1} parent=11 // pred_region
          %s205 = smul.u32 2, %s30
          %p206 = scmp.lt.s32.totalorder %s205, 1
          %s207 = scalar_select %p206, %s205, 1
          %s208 = smul.addr %s207, 8
          %s209 = scalar_lea.vmem %s3, %s208
          %s210 = smul.u32 2, %s30
        $region16: #{tpu_custom_call.1} parent=11 // pred_fallthru
          _
        // Predicated region
        $region17: #{tpu_custom_call.1} parent=11 // pred_check
          %p211 = pneg %p159
        $region18: #{tpu_custom_call.1} parent=11 // pred_check_branch
          %213 = sbr.rel (%p211) target = $region20
        $region19: #{tpu_custom_call.1} parent=11 // pred_region
          _
        $region20: #{tpu_custom_call.1} parent=11 // pred_fallthru
          _
      $region12: #{tpu_custom_call.1} parent=5 // pred_fallthru
        _
      %p214 = scmp.lt.s32.totalorder %s20, 8
      // Predicated region
      $region21: #{tpu_custom_call.1} parent=5 // pred_check
        %p215 = pneg %p214
      $region22: #{tpu_custom_call.1} parent=5 // pred_check_branch
        %217 = sbr.rel (%p215) target = $region24
      $region23: #{tpu_custom_call.1} parent=5 // pred_region
        // Predicated region
        $region25: #{tpu_custom_call.1} parent=23 // pred_check
          %p218 = pneg %p52
        $region26: #{tpu_custom_call.1} parent=23 // pred_check_branch
          %220 = sbr.rel (%p218) target = $region28
        $region27: #{tpu_custom_call.1} parent=23 // pred_region
          %s221 = sand.u32 %s42, 1
          %s222 = scalar_lea.sflag [#allocation3], %s221
          %s223 = sand.u32 %s42, 1
          %s224 = smul.addr %s223, 8
          %s225 = scalar_lea.vmem [#allocation2], %s224
          %s227 = ssub.s32 128, 128
          %228 = vsyncadd %s222, %s227
          %s229 = smul.addr %s27, 128
          %s230 = scalar_lea.hbm %s0, %s229
          %s232 = sshll.u32 %s225, 4
          %s233 = int_to_ptr.vmem [resolvable:$true] %s232
          %235 = dma.hbm_to_vmem [thread:$0]  %s230, 128, %s233, %s222
        $region28: #{tpu_custom_call.1} parent=23 // pred_fallthru
          _
        // Predicated region
        $region29: #{tpu_custom_call.1} parent=23 // pred_check
          %p236 = pneg %p78
        $region30: #{tpu_custom_call.1} parent=23 // pred_check_branch
          %238 = sbr.rel (%p236) target = $region32
        $region31: #{tpu_custom_call.1} parent=23 // pred_region
          %s239 = sand.u32 %s20, 1
          %s240 = scalar_lea.sflag [#allocation6], %s239
          %s241 = sand.u32 %s68, 1
          %s242 = smul.addr %s241, 8
          %s243 = scalar_lea.vmem [#allocation5], %s242
          %s245 = ssub.s32 128, 128
          %246 = vsyncadd %s240, %s245
          %s247 = smul.addr %s27, 128
          %s248 = scalar_lea.hbm %s1, %s247
          %s250 = sshll.u32 %s243, 4
          %s251 = int_to_ptr.vmem [resolvable:$true] %s250
          %253 = dma.hbm_to_vmem [thread:$0]  %s248, 128, %s251, %s240
        $region32: #{tpu_custom_call.1} parent=23 // pred_fallthru
          _
        // Predicated region
        $region33: #{tpu_custom_call.1} parent=23 // pred_check
          %p254 = pneg %p106
        $region34: #{tpu_custom_call.1} parent=23 // pred_check_branch
          %256 = sbr.rel (%p254) target = $region36
        $region35: #{tpu_custom_call.1} parent=23 // pred_region
          %s257 = sand.u32 %s20, 1
          %s258 = scalar_lea.sflag [#allocation6], %s257
          %s259 = sand.u32 %s96, 1
          %s260 = smul.addr %s259, 16
          %s261 = scalar_lea.vmem [#allocation7], %s260
          %s262 = smul.u32 2, %s28
          %s264 = ssub.s32 256, 256
          %265 = vsyncadd %s258, %s264
          %s266 = smul.addr %s27, 2
          %s267 = sadd.s32 %s262, %s266
          %s268 = smul.addr %s267, 128
          %s269 = scalar_lea.hbm %s2, %s268
          %s270 = sshll.u32 %s261, 4
          %s271 = int_to_ptr.vmem [resolvable:$true] %s270
          %276 = dma.hbm_to_vmem [thread:$0]  %s269, 256, %s271, %s258, 128, 128, 8
        $region36: #{tpu_custom_call.1} parent=23 // pred_fallthru
          _
      $region24: #{tpu_custom_call.1} parent=5 // pred_fallthru
        _
      %p277 = scmp.le.s32.totalorder 1, %s20
      %p278 = scmp.lt.s32.totalorder %s20, 9
      %p279 = pnand %p277, %p278
      %p280 = pneg %p279
      // Predicated region
      $region37: #{tpu_custom_call.1} parent=5 // pred_check
        _
      $region38: #{tpu_custom_call.1} parent=5 // pred_check_branch
        %282 = sbr.rel (%p279) target = $region40
      $region39: #{tpu_custom_call.1} parent=5 // pred_region
        %s283 = ssub.s32 %s20, 1
        %s284 = sand.u32 %s45, 1
        %s285 = scalar_lea.sflag [#allocation3], %s284
        %s286 = sand.u32 %s45, 1
        %s287 = smul.addr %s286, 8
        %s288 = scalar_lea.vmem [#allocation2], %s287
        // Predicated region
        $region41: #{tpu_custom_call.1} parent=39 // pred_check
          %p289 = pneg %p58
        $region42: #{tpu_custom_call.1} parent=39 // pred_check_branch
          %291 = sbr.rel (%p289) target = $region44
        $region43: #{tpu_custom_call.1} parent=39 // pred_region
          %292 = dma.done %s285, 128
        $region44: #{tpu_custom_call.1} parent=39 // pred_fallthru
          _
        %s293 = sand.u32 %s25, 1
        %s294 = scalar_lea.sflag [#allocation6], %s293
        %s295 = sand.u32 %s71, 1
        %s296 = smul.addr %s295, 8
        %s297 = scalar_lea.vmem [#allocation5], %s296
        // Predicated region
        $region45: #{tpu_custom_call.1} parent=39 // pred_check
          %p298 = pneg %p84
        $region46: #{tpu_custom_call.1} parent=39 // pred_check_branch
          %300 = sbr.rel (%p298) target = $region48
        $region47: #{tpu_custom_call.1} parent=39 // pred_region
          %301 = dma.done %s294, 128
        $region48: #{tpu_custom_call.1} parent=39 // pred_fallthru
          _
        %s302 = sand.u32 %s25, 1
        %s303 = scalar_lea.sflag [#allocation6], %s302
        %s304 = sand.u32 %s99, 1
        %s305 = smul.addr %s304, 16
        %s306 = scalar_lea.vmem [#allocation7], %s305
        // Predicated region
        $region49: #{tpu_custom_call.1} parent=39 // pred_check
          %p307 = pneg %p112
        $region50: #{tpu_custom_call.1} parent=39 // pred_check_branch
          %309 = sbr.rel (%p307) target = $region52
        $region51: #{tpu_custom_call.1} parent=39 // pred_region
          %310 = dma.done %s303, 256
        $region52: #{tpu_custom_call.1} parent=39 // pred_fallthru
          _
        %s311 = sand.u32 %s45, 1
        %s312 = scalar_lea.sflag [#allocation3], %s311
        %s313 = sand.u32 %s45, 1
        %s314 = smul.addr %s313, 8
        %s315 = scalar_lea.vmem [#allocation2], %s314
        %p316 = pneg %p58
        %p317 = pneg %p55
        %s318 = sand.u32 %s25, 1
        %s319 = scalar_lea.sflag [#allocation6], %s318
        %s320 = sand.u32 %s71, 1
        %s321 = smul.addr %s320, 8
        %s322 = scalar_lea.vmem [#allocation5], %s321
        %p323 = pneg %p84
        %p324 = pneg %p81
        %s325 = sand.u32 %s25, 1
        %s326 = scalar_lea.sflag [#allocation6], %s325
        %s327 = sand.u32 %s99, 1
        %s328 = smul.addr %s327, 16
        %s329 = scalar_lea.vmem [#allocation7], %s328
        %p330 = pneg %p112
        %p331 = pneg %p109
        %s332 = smul.u32 2, %s30
        %p333 = scmp.lt.s32.totalorder %s332, 1
        %s334 = scalar_select %p333, %s332, 1
        %s335 = smul.addr %s334, 8
        %s336 = scalar_lea.vmem %s3, %s335
        %p337 = pneg %p138
        %p338 = pneg %p135
        %p339 = pneg %p159
        %p340 = pneg %p156
        %p341 = pneg %p187
        %p342 = pneg %p184
        %s343 = sand.u32 %s174, 1
        %s344 = scalar_lea.sflag [#allocation4], %s343
        %s345 = sand.u32 %s174, 1
        %s346 = scalar_lea.vmem [#allocation8], %s345
        %s347 = smul.u32 2, %s30
        %s348 = smul.u32 2, %s30
        %p349 = scmp.lt.s32.totalorder %s348, 1
        %s350 = scalar_select %p349, %s348, 1
        %s351 = smul.addr %s350, 8
        %s352 = scalar_lea.vmem %s3, %s351
        %s353 = smul.u32 2, %s30
        %v354 = vld [vmem:[%s352] sm:$0xff]
        %v355 = vld [vmem:[%s352 + $0x8] sm:$0xff]
        %v356 = vld [vmem:[%s4] sm:$0xff]
        %v357 = vld [vmem:[%s306] sm:$0xff]
        %v358 = vld [vmem:[%s306 + $0x8] sm:$0xff]
        %v359 = vld [vmem:[%s288] sm:$0xff]
        %vm360 = vcmask 64512
        %v362 = vsel %vm360, %v354, 0
        %v365 = vsel %vm360, %v355, 0
        %367 = vmatprep.subr.mxu0 0.0
        %368 = vmatpush1.msra.mxu0 %v359
        %369 = vmatprep.subr.mxu0 0.0
        %370 = vmatpush1.msra.mxu0 0.0
        %371 = vmatprep.subr.mxu0 0.0
        %372 = vmatpush1.msra.mxu0 0.0
        %373 = vmatprep.subr.mxu0 0.0
        %374 = vmatpush1.msra.mxu0 0.0
        %375 = vmatprep.subr.mxu0 0.0
        %376 = vmatpush1.msra.mxu0 0.0
        %377 = vmatprep.subr.mxu0 0.0
        %378 = vmatpush1.msra.mxu0 0.0
        %379 = vmatprep.subr.mxu0 0.0
        %380 = vmatpush1.msra.mxu0 0.0
        %381 = vmatprep.subr.mxu0 0.0
        %382 = vmatpush1.msra.mxu0 0.0
        %383 = vmatprep.subr.mxu0 0.0
        %384 = vmatpush1.msra.mxu0 0.0
        %385 = vmatprep.subr.mxu0 0.0
        %386 = vmatpush1.msra.mxu0 0.0
        %387 = vmatprep.subr.mxu0 0.0
        %388 = vmatpush1.msra.mxu0 0.0
        %389 = vmatprep.subr.mxu0 0.0
        %390 = vmatpush1.msra.mxu0 0.0
        %391 = vmatprep.subr.mxu0 0.0
        %392 = vmatpush1.msra.mxu0 0.0
        %393 = vmatprep.subr.mxu0 0.0
        %394 = vmatpush1.msra.mxu0 0.0
        %395 = vmatprep.subr.mxu0 0.0
        %396 = vmatpush1.msra.mxu0 0.0
        %397 = vmatprep.subr.mxu0 0.0
        %398 = vmatpush1.msra.mxu0 0.0
        %399 = vmatprep.subr.mxu0 0.0
        %400 = vmatpush1.msra.mxu0 0.0
        %401 = vmatprep.subr.mxu0 0.0
        %402 = vmatpush1.msra.mxu0 0.0
        %403 = vmatprep.subr.mxu0 0.0
        %404 = vmatpush1.msra.mxu0 0.0
        %405 = vmatprep.subr.mxu0 0.0
        %406 = vmatpush1.msra.mxu0 0.0
        %407 = vmatprep.subr.mxu0 0.0
        %408 = vmatpush1.msra.mxu0 0.0
        %409 = vmatprep.subr.mxu0 0.0
        %410 = vmatpush1.msra.mxu0 0.0
        %411 = vmatprep.subr.mxu0 0.0
        %412 = vmatpush1.msra.mxu0 0.0
        %413 = vmatprep.subr.mxu0 0.0
        %414 = vmatpush1.msra.mxu0 0.0
        %415 = vmatprep.subr.mxu0 0.0
        %416 = vmatpush1.msra.mxu0 0.0
        %417 = vmatprep.subr.mxu0 0.0
        %418 = vmatpush1.msra.mxu0 0.0
        %419 = vmatprep.subr.mxu0 0.0
        %420 = vmatpush1.msra.mxu0 0.0
        %421 = vmatprep.subr.mxu0 0.0
        %422 = vmatpush1.msra.mxu0 0.0
        %423 = vmatprep.subr.mxu0 0.0
        %424 = vmatpush1.msra.mxu0 0.0
        %425 = vmatprep.subr.mxu0 0.0
        %426 = vmatpush1.msra.mxu0 0.0
        %427 = vmatprep.subr.mxu0 0.0
        %428 = vmatpush1.msra.mxu0 0.0
        %429 = vmatprep.subr.mxu0 0.0
        %430 = vmatpush1.msra.mxu0 0.0
        %431 = vmatprep.mubr.f32.mxu0 0.0
        %432 = vmatmul.mubr.f32.gmra.mrb[0].mxu0 %v362
        %v433 = vpop.f32.mrb[0].mxu0
        %v434 = vadd.f32 0.0, %v433
        %v435 = vpop.f32.mrb[0].mxu0
        %436 = vmatprep.mubr.f32.mxu0 0.0
        %437 = vmatmul.mubr.f32.gmra.mrb[0].mxu0 %v365
        %v438 = vpop.f32.mrb[0].mxu0
        %v439 = vadd.f32 0.0, %v438
        %v440 = vpop.f32.mrb[0].mxu0
        %441 = vdwg.mxu0
        %v443 = vsel %vm360, %v434, 0
        %v446 = vsel %vm360, %v439, 0
        %448 = vmatprep.subr.mxu0 0.0
        %449 = vmatpush1.msra.mxu0 %v356
        %450 = vmatprep.subr.mxu0 0.0
        %451 = vmatpush1.msra.mxu0 0.0
        %452 = vmatprep.subr.mxu0 0.0
        %453 = vmatpush1.msra.mxu0 0.0
        %454 = vmatprep.subr.mxu0 0.0
        %455 = vmatpush1.msra.mxu0 0.0
        %456 = vmatprep.subr.mxu0 0.0
        %457 = vmatpush1.msra.mxu0 0.0
        %458 = vmatprep.subr.mxu0 0.0
        %459 = vmatpush1.msra.mxu0 0.0
        %460 = vmatprep.subr.mxu0 0.0
        %461 = vmatpush1.msra.mxu0 0.0
        %462 = vmatprep.subr.mxu0 0.0
        %463 = vmatpush1.msra.mxu0 0.0
        %464 = vmatprep.subr.mxu0 0.0
        %465 = vmatpush1.msra.mxu0 0.0
        %466 = vmatprep.subr.mxu0 0.0
        %467 = vmatpush1.msra.mxu0 0.0
        %468 = vmatprep.subr.mxu0 0.0
        %469 = vmatpush1.msra.mxu0 0.0
        %470 = vmatprep.subr.mxu0 0.0
        %471 = vmatpush1.msra.mxu0 0.0
        %472 = vmatprep.subr.mxu0 0.0
        %473 = vmatpush1.msra.mxu0 0.0
        %474 = vmatprep.subr.mxu0 0.0
        %475 = vmatpush1.msra.mxu0 0.0
        %476 = vmatprep.subr.mxu0 0.0
        %477 = vmatpush1.msra.mxu0 0.0
        %478 = vmatprep.subr.mxu0 0.0
        %479 = vmatpush1.msra.mxu0 0.0
        %480 = vmatprep.subr.mxu0 0.0
        %481 = vmatpush1.msra.mxu0 0.0
        %482 = vmatprep.subr.mxu0 0.0
        %483 = vmatpush1.msra.mxu0 0.0
        %484 = vmatprep.subr.mxu0 0.0
        %485 = vmatpush1.msra.mxu0 0.0
        %486 = vmatprep.subr.mxu0 0.0
        %487 = vmatpush1.msra.mxu0 0.0
        %488 = vmatprep.subr.mxu0 0.0
        %489 = vmatpush1.msra.mxu0 0.0
        %490 = vmatprep.subr.mxu0 0.0
        %491 = vmatpush1.msra.mxu0 0.0
        %492 = vmatprep.subr.mxu0 0.0
        %493 = vmatpush1.msra.mxu0 0.0
        %494 = vmatprep.subr.mxu0 0.0
        %495 = vmatpush1.msra.mxu0 0.0
        %496 = vmatprep.subr.mxu0 0.0
        %497 = vmatpush1.msra.mxu0 0.0
        %498 = vmatprep.subr.mxu0 0.0
        %499 = vmatpush1.msra.mxu0 0.0
        %500 = vmatprep.subr.mxu0 0.0
        %501 = vmatpush1.msra.mxu0 0.0
        %502 = vmatprep.subr.mxu0 0.0
        %503 = vmatpush1.msra.mxu0 0.0
        %504 = vmatprep.subr.mxu0 0.0
        %505 = vmatpush1.msra.mxu0 0.0
        %506 = vmatprep.subr.mxu0 0.0
        %507 = vmatpush1.msra.mxu0 0.0
        %508 = vmatprep.subr.mxu0 0.0
        %509 = vmatpush1.msra.mxu0 0.0
        %510 = vmatprep.subr.mxu0 0.0
        %511 = vmatpush1.msra.mxu0 0.0
        %512 = vmatprep.mubr.f32.mxu0 0.0
        %513 = vmatmul.mubr.f32.gmra.mrb[0].mxu0 %v443
        %v514 = vpop.f32.mrb[0].mxu0
        %v515 = vadd.f32 0.0, %v514
        %v516 = vpop.f32.mrb[0].mxu0
        %517 = vmatprep.mubr.f32.mxu0 0.0
        %518 = vmatmul.mubr.f32.gmra.mrb[0].mxu0 %v446
        %v519 = vpop.f32.mrb[0].mxu0
        %v520 = vadd.f32 0.0, %v519
        %v521 = vpop.f32.mrb[0].mxu0
        %522 = vdwg.mxu0
        %v523 = vmax.f32 %v515, 0.0
        %v524 = vmax.f32 %v520, 0.0
        %v525 = vmul.f32 %v515, %v357
        %v526 = vmul.f32 %v520, %v358
        %v527 = vsub.f32 %v523, %v525
        %v528 = vsub.f32 %v524, %v526
        %v529 = vand.u32 2147483647, %v515
        %v530 = vand.u32 2147483647, %v520
        %v531 = vsub.f32 0.0, %v529
        %v532 = vsub.f32 0.0, %v530
        %v533 = vmul.f32 %v531, 1.442695
        %v534 = vpow.pop %v533
        %v535 = vmul.f32 %v532, 1.442695
        %v536 = vpow.pop %v535
        %v537 = vadd.f32 %v534, 1.0
        %v538 = vlog2.pop %v537
        %v539 = vmul.f32 %v538, 0.6931472
        %v540 = vmul.f32 -0.5, %v534
        %v541 = vadd.f32 %v540, 1.0
        %v542 = vmul.f32 %v541, %v534
        %v543 = vand.u32 2147483647, %v534
        %vm544 = vcmp.lt.f32.partialorder %v543, 0.0004427343
        %v545 = vsel %vm544, %v542, %v539
        %v546 = vadd.f32 %v536, 1.0
        %v547 = vlog2.pop %v546
        %v548 = vmul.f32 %v547, 0.6931472
        %v549 = vmul.f32 -0.5, %v536
        %v550 = vadd.f32 %v549, 1.0
        %v551 = vmul.f32 %v550, %v536
        %v552 = vand.u32 2147483647, %v536
        %vm553 = vcmp.lt.f32.partialorder %v552, 0.0004427343
        %v554 = vsel %vm553, %v551, %v548
        %v555 = vadd.f32 %v527, %v545
        %v556 = vadd.f32 %v528, %v554
        %v557 = vmul.f32 %v555, 0.4
        %v558 = vmul.f32 %v556, 0.4
        %v559 = vld [vmem:[%s297] sm:$0xff]
        %560 = vmatprep.subr.mxu0 0.0
        %561 = vmatpush1.msra.mxu0 %v559
        %562 = vmatprep.subr.mxu0 0.0
        %563 = vmatpush1.msra.mxu0 0.0
        %564 = vmatprep.subr.mxu0 0.0
        %565 = vmatpush1.msra.mxu0 0.0
        %566 = vmatprep.subr.mxu0 0.0
        %567 = vmatpush1.msra.mxu0 0.0
        %568 = vmatprep.subr.mxu0 0.0
        %569 = vmatpush1.msra.mxu0 0.0
        %570 = vmatprep.subr.mxu0 0.0
        %571 = vmatpush1.msra.mxu0 0.0
        %572 = vmatprep.subr.mxu0 0.0
        %573 = vmatpush1.msra.mxu0 0.0
        %574 = vmatprep.subr.mxu0 0.0
        %575 = vmatpush1.msra.mxu0 0.0
        %576 = vmatprep.subr.mxu0 0.0
        %577 = vmatpush1.msra.mxu0 0.0
        %578 = vmatprep.subr.mxu0 0.0
        %579 = vmatpush1.msra.mxu0 0.0
        %580 = vmatprep.subr.mxu0 0.0
        %581 = vmatpush1.msra.mxu0 0.0
        %582 = vmatprep.subr.mxu0 0.0
        %583 = vmatpush1.msra.mxu0 0.0
        %584 = vmatprep.subr.mxu0 0.0
        %585 = vmatpush1.msra.mxu0 0.0
        %586 = vmatprep.subr.mxu0 0.0
        %587 = vmatpush1.msra.mxu0 0.0
        %588 = vmatprep.subr.mxu0 0.0
        %589 = vmatpush1.msra.mxu0 0.0
        %590 = vmatprep.subr.mxu0 0.0
        %591 = vmatpush1.msra.mxu0 0.0
        %592 = vmatprep.subr.mxu0 0.0
        %593 = vmatpush1.msra.mxu0 0.0
        %594 = vmatprep.subr.mxu0 0.0
        %595 = vmatpush1.msra.mxu0 0.0
        %596 = vmatprep.subr.mxu0 0.0
        %597 = vmatpush1.msra.mxu0 0.0
        %598 = vmatprep.subr.mxu0 0.0
        %599 = vmatpush1.msra.mxu0 0.0
        %600 = vmatprep.subr.mxu0 0.0
        %601 = vmatpush1.msra.mxu0 0.0
        %602 = vmatprep.subr.mxu0 0.0
        %603 = vmatpush1.msra.mxu0 0.0
        %604 = vmatprep.subr.mxu0 0.0
        %605 = vmatpush1.msra.mxu0 0.0
        %606 = vmatprep.subr.mxu0 0.0
        %607 = vmatpush1.msra.mxu0 0.0
        %608 = vmatprep.subr.mxu0 0.0
        %609 = vmatpush1.msra.mxu0 0.0
        %610 = vmatprep.subr.mxu0 0.0
        %611 = vmatpush1.msra.mxu0 0.0
        %612 = vmatprep.subr.mxu0 0.0
        %613 = vmatpush1.msra.mxu0 0.0
        %614 = vmatprep.subr.mxu0 0.0
        %615 = vmatpush1.msra.mxu0 0.0
        %616 = vmatprep.subr.mxu0 0.0
        %617 = vmatpush1.msra.mxu0 0.0
        %618 = vmatprep.subr.mxu0 0.0
        %619 = vmatpush1.msra.mxu0 0.0
        %620 = vmatprep.subr.mxu0 0.0
        %621 = vmatpush1.msra.mxu0 0.0
        %622 = vmatprep.subr.mxu0 0.0
        %623 = vmatpush1.msra.mxu0 0.0
        %624 = vmatprep.mubr.f32.mxu0 0.0
        %625 = vmatmul.mubr.f32.gmra.mrb[0].mxu0 %v362
        %v626 = vpop.f32.mrb[0].mxu0
        %v627 = vadd.f32 0.0, %v626
        %v628 = vpop.f32.mrb[0].mxu0
        %629 = vmatprep.mubr.f32.mxu0 0.0
        %630 = vmatmul.mubr.f32.gmra.mrb[0].mxu0 %v365
        %v631 = vpop.f32.mrb[0].mxu0
        %v632 = vadd.f32 0.0, %v631
        %v633 = vpop.f32.mrb[0].mxu0
        %634 = vdwg.mxu0
        %v636 = vsel %vm360, %v627, 0
        %v639 = vsel %vm360, %v632, 0
        %641 = vmatprep.subr.mxu0 0.0
        %642 = vmatpush1.msra.mxu0 %v356
        %643 = vmatprep.subr.mxu0 0.0
        %644 = vmatpush1.msra.mxu0 0.0
        %645 = vmatprep.subr.mxu0 0.0
        %646 = vmatpush1.msra.mxu0 0.0
        %647 = vmatprep.subr.mxu0 0.0
        %648 = vmatpush1.msra.mxu0 0.0
        %649 = vmatprep.subr.mxu0 0.0
        %650 = vmatpush1.msra.mxu0 0.0
        %651 = vmatprep.subr.mxu0 0.0
        %652 = vmatpush1.msra.mxu0 0.0
        %653 = vmatprep.subr.mxu0 0.0
        %654 = vmatpush1.msra.mxu0 0.0
        %655 = vmatprep.subr.mxu0 0.0
        %656 = vmatpush1.msra.mxu0 0.0
        %657 = vmatprep.subr.mxu0 0.0
        %658 = vmatpush1.msra.mxu0 0.0
        %659 = vmatprep.subr.mxu0 0.0
        %660 = vmatpush1.msra.mxu0 0.0
        %661 = vmatprep.subr.mxu0 0.0
        %662 = vmatpush1.msra.mxu0 0.0
        %663 = vmatprep.subr.mxu0 0.0
        %664 = vmatpush1.msra.mxu0 0.0
        %665 = vmatprep.subr.mxu0 0.0
        %666 = vmatpush1.msra.mxu0 0.0
        %667 = vmatprep.subr.mxu0 0.0
        %668 = vmatpush1.msra.mxu0 0.0
        %669 = vmatprep.subr.mxu0 0.0
        %670 = vmatpush1.msra.mxu0 0.0
        %671 = vmatprep.subr.mxu0 0.0
        %672 = vmatpush1.msra.mxu0 0.0
        %673 = vmatprep.subr.mxu0 0.0
        %674 = vmatpush1.msra.mxu0 0.0
        %675 = vmatprep.subr.mxu0 0.0
        %676 = vmatpush1.msra.mxu0 0.0
        %677 = vmatprep.subr.mxu0 0.0
        %678 = vmatpush1.msra.mxu0 0.0
        %679 = vmatprep.subr.mxu0 0.0
        %680 = vmatpush1.msra.mxu0 0.0
        %681 = vmatprep.subr.mxu0 0.0
        %682 = vmatpush1.msra.mxu0 0.0
        %683 = vmatprep.subr.mxu0 0.0
        %684 = vmatpush1.msra.mxu0 0.0
        %685 = vmatprep.subr.mxu0 0.0
        %686 = vmatpush1.msra.mxu0 0.0
        %687 = vmatprep.subr.mxu0 0.0
        %688 = vmatpush1.msra.mxu0 0.0
        %689 = vmatprep.subr.mxu0 0.0
        %690 = vmatpush1.msra.mxu0 0.0
        %691 = vmatprep.subr.mxu0 0.0
        %692 = vmatpush1.msra.mxu0 0.0
        %693 = vmatprep.subr.mxu0 0.0
        %694 = vmatpush1.msra.mxu0 0.0
        %695 = vmatprep.subr.mxu0 0.0
        %696 = vmatpush1.msra.mxu0 0.0
        %697 = vmatprep.subr.mxu0 0.0
        %698 = vmatpush1.msra.mxu0 0.0
        %699 = vmatprep.subr.mxu0 0.0
        %700 = vmatpush1.msra.mxu0 0.0
        %701 = vmatprep.subr.mxu0 0.0
        %702 = vmatpush1.msra.mxu0 0.0
        %703 = vmatprep.subr.mxu0 0.0
        %704 = vmatpush1.msra.mxu0 0.0
        %705 = vmatprep.mubr.f32.mxu0 0.0
        %706 = vmatmul.mubr.f32.gmra.mrb[0].mxu0 %v636
        %v707 = vpop.f32.mrb[0].mxu0
        %v708 = vadd.f32 0.0, %v707
        %v709 = vpop.f32.mrb[0].mxu0
        %710 = vmatprep.mubr.f32.mxu0 0.0
        %711 = vmatmul.mubr.f32.gmra.mrb[0].mxu0 %v639
        %v712 = vpop.f32.mrb[0].mxu0
        %v713 = vadd.f32 0.0, %v712
        %v714 = vpop.f32.mrb[0].mxu0
        %715 = vdwg.mxu0
        %v716 = vmax.f32 %v708, 0.0
        %v717 = vmax.f32 %v713, 0.0
        %v718 = vmul.f32 %v708, %v357
        %v719 = vmul.f32 %v713, %v358
        %v720 = vsub.f32 %v716, %v718
        %v721 = vsub.f32 %v717, %v719
        %v722 = vand.u32 2147483647, %v708
        %v723 = vand.u32 2147483647, %v713
        %v724 = vsub.f32 0.0, %v722
        %v725 = vsub.f32 0.0, %v723
        %v726 = vmul.f32 %v724, 1.442695
        %v727 = vpow.pop %v726
        %v728 = vmul.f32 %v725, 1.442695
        %v729 = vpow.pop %v728
        %v730 = vadd.f32 %v727, 1.0
        %v731 = vlog2.pop %v730
        %v732 = vmul.f32 %v731, 0.6931472
        %v733 = vmul.f32 -0.5, %v727
        %v734 = vadd.f32 %v733, 1.0
        %v735 = vmul.f32 %v734, %v727
        %v736 = vand.u32 2147483647, %v727
        %vm737 = vcmp.lt.f32.partialorder %v736, 0.0004427343
        %v738 = vsel %vm737, %v735, %v732
        %v739 = vadd.f32 %v729, 1.0
        %v740 = vlog2.pop %v739
        %v741 = vmul.f32 %v740, 0.6931472
        %v742 = vmul.f32 -0.5, %v729
        %v743 = vadd.f32 %v742, 1.0
        %v744 = vmul.f32 %v743, %v729
        %v745 = vand.u32 2147483647, %v729
        %vm746 = vcmp.lt.f32.partialorder %v745, 0.0004427343
        %v747 = vsel %vm746, %v744, %v741
        %v748 = vadd.f32 %v720, %v738
        %v749 = vadd.f32 %v721, %v747
        %v750 = vadd.f32 %v557, %v748
        %v751 = vadd.f32 %v558, %v749
        %vm752 = vcmask 130048
        %v753 = vsel %vm752, %v750, 0.0
        %v754 = vsel %vm752, %v751, 0.0
        %v755 = vadd.f32 %v753, %v754
        %v756 = vrot.slane %v755, 4
        %v757 = vadd.f32 %v755, %v756
        %v758 = vrot.slane %v757, 2
        %v759 = vadd.f32 %v757, %v758
        %v760 = vrot.slane %v759, 1
        %v761 = vadd.f32 %v759, %v760
        %vm762 = vcmask 122880
        %763 = vst.msk [vmem:[%s346] sm:$0x1] %vm762, %v761
        %s764 = sand.u32 %s174, 1
        %s765 = scalar_lea.sflag [#allocation4], %s764
        %s766 = sand.u32 %s174, 1
        %s767 = scalar_lea.vmem [#allocation8], %s766
        // Predicated region
        $region53: #{tpu_custom_call.1} parent=39 // pred_check
          %p768 = pneg %p184
        $region54: #{tpu_custom_call.1} parent=39 // pred_check_branch
          %770 = sbr.rel (%p768) target = $region56
        $region55: #{tpu_custom_call.1} parent=39 // pred_region
          %s772 = ssub.s32 16, 16
          %773 = vsyncadd %s765, %s772
          %s774 = sadd.s32 %s30, %s29
          %s775 = smul.addr %s774, 16
          %s776 = scalar_lea.hbm %s5, %s775
          %s778 = sshll.u32 %s767, 4
          %s779 = int_to_ptr.vmem [resolvable:$true] %s778
          %781 = dma.vmem_to_hbm [thread:$0]  %s779, 16, %s776, %s765
        $region56: #{tpu_custom_call.1} parent=39 // pred_fallthru
          _
      $region40: #{tpu_custom_call.1} parent=5 // pred_fallthru
        _
      %p782 = scmp.le.s32.totalorder 2, %s20
      // Predicated region
      $region57: #{tpu_custom_call.1} parent=5 // pred_check
        %p783 = pneg %p782
      $region58: #{tpu_custom_call.1} parent=5 // pred_check_branch
        %785 = sbr.rel (%p783) target = $region60
      $region59: #{tpu_custom_call.1} parent=5 // pred_region
        %s786 = ssub.s32 %s20, 2
        // Predicated region
        $region61: #{tpu_custom_call.1} parent=59 // pred_check
          %p787 = pneg %p190
        $region62: #{tpu_custom_call.1} parent=59 // pred_check_branch
          %789 = sbr.rel (%p787) target = $region64
        $region63: #{tpu_custom_call.1} parent=59 // pred_region
          %s790 = sand.u32 %s175, 1
          %s791 = scalar_lea.sflag [#allocation4], %s790
          %s792 = sand.u32 %s175, 1
          %s793 = scalar_lea.vmem [#allocation8], %s792
          %794 = dma.done %s791, 16
        $region64: #{tpu_custom_call.1} parent=59 // pred_fallthru
          _
      $region60: #{tpu_custom_call.1} parent=5 // pred_fallthru
        _
    $region6: #{tpu_custom_call.1} parent=1 // loop_footer
      %s24 = sadd.s32 1, %s20
    $region7: #{tpu_custom_call.1} parent=1 // loop_footer_branch
      %19 = sbr.rel target = $region3
    $region8: #{tpu_custom_call.1} parent=1 // loop_exit
      _
    %795 = vsyncpa [#allocation3], 1
    %s796 = scalar_lea.sflag [#allocation3], 1
    %797 = vsyncpa %s796, 1
    %798 = vsyncpa [#allocation6], 1
    %s799 = scalar_lea.sflag [#allocation6], 1
    %800 = vsyncpa %s799, 1
    %801 = vsyncpa [#allocation4], 1
    %s802 = scalar_lea.sflag [#allocation4], 1
    %803 = vsyncpa %s802, 1

</llo_original>
